<compile_context>
chip_gen: v6e
topology: v6e:2x2x1
jax: 0.10.0
libtpu: 0.0.40
codegen_flags: <defaults>
</compile_context>

<pallas_src>
import math

import jax
import jax.numpy as jnp
from jax.experimental import pallas as pl
from jax.experimental.pallas import tpu as pltpu


def _make_mlb_kernel(use_normalization: bool, n_basis: int):
    R = n_basis

    def mlb_kernel(w_ref, x_ref, b_ref, o_ref):
        w = w_ref[...]                       # (2R, C)     grid-invariant
        x = x_ref[...]                       # (C, tile_t) one batch, one T tile
        bias = b_ref[...]                    # (R, 1)      grid-invariant

        # Single fused MXU matmul: (2R, C) @ (C, tile_t) -> (2R, tile_t).
        y = jnp.dot(w, x, preferred_element_type=jnp.float32)

        # Static, sublane-aligned split (R == 8 -> exactly one f32 sublane group).
        xer = y[:R]                          # (R, tile_t)
        xfr = y[R:]                          # (R, tile_t)

        out = xer * xfr + bias               # bias broadcasts over lanes

        if use_normalization:
            # signed sqrt: sign(out) * (sqrt(|out| + 0.01) - sqrt(0.01))
            out = jnp.sign(out) * (jnp.sqrt(jnp.abs(out) + 0.01) - math.sqrt(0.01))
            # channel max over the basis axis (rows), independently per (b, t).
            max_vals = jnp.max(jnp.abs(out), axis=0, keepdims=True)   # (1, tile_t)
            # Exact reciprocal keeps the 1e-4 check tight; approx=True would use
            # the idle EUP slot, but its ~2^-12 error can brush the tolerance and
            # the kernel is mem-bound anyway.
            inv = pl.reciprocal(max_vals + 1e-05, approx=False)
            out = out * inv

        o_ref[...] = out.astype(o_ref.dtype)

    return mlb_kernel


def _plan_t_tiling(B: int, T: int, max_tile: int):
    """Return (T_pad, tile_t) for the lane (time) axis.

    * T <= max_tile: take the full extent as one block (legal since the block
      equals the array dim; <= 2 MiB of x per block at max_tile=8192).
    * Otherwise tile at max_tile and pad T up to a multiple of it (bounded
      VMEM, unmasked lane-dense 128-multiple stores).
    """
    if T <= max_tile:
        T_pad, tile_t = T, T
    else:
        tile_t = max_tile
        T_pad = pl.cdiv(T, tile_t) * tile_t

    # Keep >= 2 parallel grid steps when we can so both v7x TensorCores get
    # work (a no-op here since B >= 2 in the demo; harmless on v5e/v6e).
    if B * (T_pad // tile_t) < 2 and T_pad >= 256 and T_pad % 256 == 0:
        tile_t = T_pad // 2

    return T_pad, tile_t


def mlb_pooling(x, Er, Fr, b, *, use_normalization=False, max_tile=8192):
    """x: [B, C, T] f32; Er, Fr: [C, R]; b: [1, R, 1]. Returns [B, R, T] f32."""
    B, C, T = x.shape
    Cr, R = Er.shape
    assert C == Cr and Fr.shape == (C, R) and b.shape == (1, R, 1)

    T_pad, tile_t = _plan_t_tiling(B, T, max_tile)
    num_t = T_pad // tile_t

    # Zero-pad only when the T axis must be tiled; padded columns are inert
    # (out = 0*0 + b there) and are sliced off below.
    x_in = x if T_pad == T else jnp.pad(x, ((0, 0), (0, 0), (0, T_pad - T)))

    # Tiny parameter plumbing (16 x 64 for the defaults) — negligible traffic.
    w = jnp.concatenate([Er, Fr], axis=1).T.astype(jnp.float32)   # (2R, C)
    bias = b.reshape(R, 1).astype(jnp.float32)                    # (R, 1)
    # NOTE: casting x/w to bf16 would roughly halve HBM traffic for this
    # mem-bound kernel, but breaks the 1e-4 check vs the f32 reference, so it
    # is intentionally left off.

    kernel = _make_mlb_kernel(use_normalization, R)

    out = pl.pallas_call(
        kernel,
        out_shape=jax.ShapeDtypeStruct((B, R, T_pad), jnp.float32),
        grid_spec=pltpu.PrefetchScalarGridSpec(
            num_scalar_prefetch=0,
            grid=(B, num_t),
            in_specs=[
                pl.BlockSpec((2 * R, C), lambda bi, ti: (0, 0)),     # fused W (resident)
                pl.BlockSpec((pl.Squeezed(), C, tile_t),
                             lambda bi, ti: (bi, 0, ti)),            # x tile (native layout)
                pl.BlockSpec((R, 1), lambda bi, ti: (0, 0)),         # bias (resident)
            ],
            out_specs=pl.BlockSpec((pl.Squeezed(), R, tile_t),
                                   lambda bi, ti: (bi, 0, ti)),      # writes straight to [B,R,T]
        ),
        compiler_params=pltpu.CompilerParams(
            dimension_semantics=("parallel", "parallel"),
            vmem_limit_bytes=32 * 1024 * 1024,
        ),
    )(w, x_in, bias)

    return out if T_pad == T else out[:, :, :T]


def mlb_pooling_ref(x, Er, Fr, b, *, use_normalization=False):
    """Pure-JAX reference mirroring the torch forward."""
    xer = jnp.einsum("bct,cr->brt", x, Er)
    xfr = jnp.einsum("bct,cr->brt", x, Fr)
    out = xer * xfr + b
    if use_normalization:
        out = jnp.sign(out) * (jnp.sqrt(jnp.abs(out) + 0.01) - math.sqrt(0.01))
        max_vals = jnp.max(jnp.abs(out), axis=1, keepdims=True)
        out = out / (max_vals + 1e-05)
    return out


if __name__ == "__main__":
    # Module hyperparameters (from __init__): in_dim = 64, n_basis = 8.
    n_basis = 8
    in_dim = 64
    batch = 2
    seq = 16

    key = jax.random.PRNGKey(0)
    kx, ke, kf, kx2 = jax.random.split(key, 4)

    # Deterministic "standard normal" parameter init (synthetic, no checkpoint).
    x = jax.random.normal(kx, (batch, in_dim, seq), dtype=jnp.float32)
    Er = jax.random.normal(ke, (in_dim, n_basis), dtype=jnp.float32)
    Fr = jax.random.normal(kf, (in_dim, n_basis), dtype=jnp.float32)
    b = jnp.zeros((1, n_basis, 1), dtype=jnp.float32)

    # Default path (use_normalization=False, as in the module default).
    out = jax.block_until_ready(mlb_pooling(x, Er, Fr, b, use_normalization=False))
    ref = mlb_pooling_ref(x, Er, Fr, b, use_normalization=False)
    assert out.shape == (batch, n_basis, seq)
    assert jnp.allclose(out, ref, atol=1e-4, rtol=1e-4)

    # Normalization branch.
    out_n = jax.block_until_ready(mlb_pooling(x, Er, Fr, b, use_normalization=True))
    ref_n = mlb_pooling_ref(x, Er, Fr, b, use_normalization=True)
    assert jnp.allclose(out_n, ref_n, atol=1e-4, rtol=1e-4)

    # Ragged-T / padded multi-tile path (forces tile_t=128, T padded 200 -> 256,
    # grid = (2, 2)) to exercise the padding code at small size.
    seq2 = 200
    x2 = jax.random.normal(kx2, (batch, in_dim, seq2), dtype=jnp.float32)
    out_p = jax.block_until_ready(
        mlb_pooling(x2, Er, Fr, b, use_normalization=False, max_tile=128))
    ref_p = mlb_pooling_ref(x2, Er, Fr, b, use_normalization=False)
    assert out_p.shape == (batch, n_basis, seq2)
    assert jnp.allclose(out_p, ref_p, atol=1e-4, rtol=1e-4)

    print("KERNEL_OK")
</pallas_src>

<mosaic_0001>
module attributes {stable_mosaic.version = 11 : i64} {
  func.func @mlb_kernel(%arg0: i32, %arg1: i32, %arg2: memref<16x64xf32, #tpu.memory_space<vmem>>, %arg3: memref<1x64x16xf32, #tpu.memory_space<vmem>>, %arg4: memref<8x1xf32, #tpu.memory_space<vmem>>, %arg5: memref<1x8x16xf32, #tpu.memory_space<vmem>>) attributes {dimension_semantics = [#tpu.dimension_semantics<parallel>, #tpu.dimension_semantics<parallel>], iteration_bounds = array<i64: 2, 1>, scalar_prefetch = 0 : i64, scratch_operands = 0 : i64, tpu.core_type = #tpu.core_type<tc>, window_params = [{pipeline_mode = #tpu.pipeline_mode<synchronous>, transform_indices = @transform_0, window_bounds = array<i64: 16, 64>}, {transform_indices = @transform_1, window_bounds = array<i64: 1, 64, 16>}, {pipeline_mode = #tpu.pipeline_mode<synchronous>, transform_indices = @transform_2, window_bounds = array<i64: 8, 1>}, {transform_indices = @transform_3, window_bounds = array<i64: 1, 8, 16>}]} {
    %c0 = arith.constant 0 : index
    %c0_0 = arith.constant 0 : index
    %0 = vector.load %arg2[%c0, %c0_0] : memref<16x64xf32, #tpu.memory_space<vmem>>, vector<16x64xf32>
    %c0_1 = arith.constant 0 : index
    %c0_2 = arith.constant 0 : index
    %c0_3 = arith.constant 0 : index
    %1 = vector.load %arg3[%c0_1, %c0_2, %c0_3] : memref<1x64x16xf32, #tpu.memory_space<vmem>>, vector<1x64x16xf32>
    %2 = vector.shape_cast %1 : vector<1x64x16xf32> to vector<64x16xf32>
    %c0_4 = arith.constant 0 : index
    %c0_5 = arith.constant 0 : index
    %3 = vector.load %arg4[%c0_4, %c0_5] : memref<8x1xf32, #tpu.memory_space<vmem>>, vector<8x1xf32>
    %cst = arith.constant dense<0.000000e+00> : vector<16x16xf32>
    %4 = tpu.matmul %0, %2, %cst {dimension_numbers = #tpu.dot_dimension_numbers<[1], [0], [0], [1], [0, 0, 1, 1], [], []>} : vector<16x64xf32>, vector<64x16xf32>, vector<16x16xf32> -> vector<16x16xf32>
    %5 = vector.extract_strided_slice %4 {offsets = [0, 0], sizes = [8, 16], strides = [1, 1]} : vector<16x16xf32> to vector<8x16xf32>
    %6 = vector.extract_strided_slice %4 {offsets = [8, 0], sizes = [8, 16], strides = [1, 1]} : vector<16x16xf32> to vector<8x16xf32>
    %7 = arith.mulf %5, %6 : vector<8x16xf32>
    %8 = vector.broadcast %3 : vector<8x1xf32> to vector<8x16xf32>
    %9 = arith.addf %7, %8 : vector<8x16xf32>
    %c0_6 = arith.constant 0 : index
    %c0_7 = arith.constant 0 : index
    %c0_8 = arith.constant 0 : index
    %10 = vector.load %arg5[%c0_6, %c0_7, %c0_8] : memref<1x8x16xf32, #tpu.memory_space<vmem>>, vector<1x8x16xf32>
    %11 = vector.shape_cast %10 : vector<1x8x16xf32> to vector<8x16xf32>
    %12 = vector.shape_cast %9 : vector<8x16xf32> to vector<1x8x16xf32>
    tpu.vector_store %arg5[%c0_6, %c0_7, %c0_8], %12 {strides = array<i32>} : memref<1x8x16xf32, #tpu.memory_space<vmem>>, vector<1x8x16xf32>,
    return
  }
  func.func @transform_0(%arg0: i32, %arg1: i32) -> (i32, i32) {
    %c0_i32 = arith.constant 0 : i32
    %c0_i32_0 = arith.constant 0 : i32
    %c0_i32_1 = arith.constant 0 : i32
    return %c0_i32, %c0_i32_0 : i32, i32
  }
  func.func @transform_1(%arg0: i32, %arg1: i32) -> (i32, i32, i32) {
    %c0_i32 = arith.constant 0 : i32
    %c0_i32_0 = arith.constant 0 : i32
    return %arg0, %c0_i32, %arg1 : i32, i32, i32
  }
  func.func @transform_2(%arg0: i32, %arg1: i32) -> (i32, i32) {
    %c0_i32 = arith.constant 0 : i32
    %c0_i32_0 = arith.constant 0 : i32
    %c0_i32_1 = arith.constant 0 : i32
    return %c0_i32, %c0_i32_0 : i32, i32
  }
  func.func @transform_3(%arg0: i32, %arg1: i32) -> (i32, i32, i32) {
    %c0_i32 = arith.constant 0 : i32
    %c0_i32_0 = arith.constant 0 : i32
    return %arg0, %c0_i32, %arg1 : i32, i32, i32
  }
}

</mosaic_0001>

<llo_original>
// kernel: tpu_custom_call.1
$region0: #{tpu_custom_call.1}
  #allocation0 [shape = 'u32[]', space=smem, size = 0x4, offset = 0x4, fixed_abs, tag = 'smem constant byte address 0x4 - core index']
  #allocation1 [shape = 'u32[144,128]{1,0:T(1,128)}', space=vmem, size = 0x12000, scoped, tag = 'internal scratch']
  %s0 = inlined_call_operand.vmem [shape: f32[16,64], index: 0, kind: input, shape index: {}]
  %s1 = inlined_call_operand.vmem [shape: f32[2,64,16], index: 1, kind: input, shape index: {}]
  %s2 = inlined_call_operand.vmem [shape: f32[8,1], index: 2, kind: input, shape index: {}]
  %s3 = inlined_call_operand.hbm [shape: f32[2,8,16], index: 3, kind: output, shape index: {}]
  %s4 = sld [smem:[#allocation0]]
  $region45: #{tpu_custom_call.1} parent=0
    _
  %s6 = ssub.s32 1, %s4
  %s7 = scalar_select 0, %s6, %s4
  $region1: #{tpu_custom_call.1} parent=0
    #allocation2 [shape = 'u8[8192]{0}', space=vmem, size = 0x2000, scoped, tag = 'output window, operand 0']
    #allocation3 [shape = 's32[2]{0}', space=sflag, size = 0x8, scoped, tag = 'scoped memory for tpu_custom_call.1']
    %8 = vsyncpa [#allocation3], 0
    %s9 = scalar_lea.sflag [#allocation3], 1
    %10 = vsyncpa %s9, 0
    loop: start=0, step=1, limit=4
    $region2: #{tpu_custom_call.1} parent=1 // loop_pre_header
      _
    $region3: #{tpu_custom_call.1} parent=1 // loop_header
      %s12 = sphi 0, %s16
      %p13 = scmp.ge.s32.totalorder %s12, 4
      %s19 = sphi 0, %s31
      %s20 = sphi 0, %s27
      %s21 = sphi 0, %s19
      %s22 = sphi 0, %s20
      %s23 = sphi 0, %s21
      %s24 = sphi 0, %s22
      %s32 = sphi 0, %s32
      %s34 = sphi 0, %s32
      %s35 = sphi 0, %s34
      %s49 = sphi 0, %s35
      %s57 = sphi 0, %s59
      %s60 = sphi 0, %s57
      %s61 = sphi 0, %s60
      %s77 = sphi 0, %s61
      %s81 = sphi 0, %s81
      %s83 = sphi 0, %s81
      %s84 = sphi 0, %s83
      %s98 = sphi 0, %s84
      %s106 = sphi 0, %s108
      %s109 = sphi 0, %s106
      %s110 = sphi 0, %s109
      %s126 = sphi 0, %s110
    $region4: #{tpu_custom_call.1} parent=1 // loop_header_branch
      %15 = sbr.rel (%p13) target = $region8
    $region5: #{tpu_custom_call.1} parent=1 // loop_body
      %s17 = ssub.s32 %s12, 1
      %s18 = ssub.s32 %s12, 2
      %s25 = sadd.s32 1, %s20
      %p26 = scmp.ge.s32.totalorder %s25, 1
      %s27 = scalar_select %p26, 0, %s25
      %s28 = sadd.s32 1, %s19
      %s29 = scalar_select %p26, %s28, %s19
      %p30 = scmp.ge.s32.totalorder %s29, 2
      %s31 = scalar_select %p30, 0, %s29
      %s33 = sadd.s32 %s32, 1
      %p36 = scmp.eq.s32.totalorder %s12, 1
      %p37 = scmp.ne.s32.totalorder %s32, %s34
      %p38 = scmp.eq.s32.totalorder %s12, 0
      %p39 = por %p37, %p38
      %p40 = scmp.ne.s32.totalorder %s32, %s34
      %p41 = scmp.eq.s32.totalorder %s17, 1
      %p42 = por %p40, %p41
      %p43 = scmp.ne.s32.totalorder %s34, %s35
      %p44 = scmp.eq.s32.totalorder %s17, 0
      %p45 = por %p43, %p44
      %p46 = scmp.ne.s32.totalorder %s34, %s35
      %p47 = scmp.eq.s32.totalorder %s18, 1
      %p48 = por %p46, %p47
      %p50 = scmp.ne.s32.totalorder %s35, %s49
      %p51 = scmp.eq.s32.totalorder %s18, 0
      %p52 = por %p50, %p51
      %s53 = ssub.s32 %s19, %s31
      %s54 = ssub.s32 %s20, %s27
      %s55 = sor.u32 %s53, %s54
      %p56 = scmp.eq.s32.totalorder %s55, 0
      %s58 = sadd.s32 %s57, 1
      %s59 = scalar_select %p56, %s57, %s58
      %p62 = pneg %p56
      %p63 = scmp.eq.s32.totalorder %s12, 1
      %p64 = por %p62, %p63
      %p65 = scmp.ne.s32.totalorder %s57, %s60
      %p66 = scmp.eq.s32.totalorder %s12, 0
      %p67 = por %p65, %p66
      %p68 = scmp.ne.s32.totalorder %s57, %s60
      %p69 = scmp.eq.s32.totalorder %s17, 1
      %p70 = por %p68, %p69
      %p71 = scmp.ne.s32.totalorder %s60, %s61
      %p72 = scmp.eq.s32.totalorder %s17, 0
      %p73 = por %p71, %p72
      %p74 = scmp.ne.s32.totalorder %s60, %s61
      %p75 = scmp.eq.s32.totalorder %s18, 1
      %p76 = por %p74, %p75
      %p78 = scmp.ne.s32.totalorder %s61, %s77
      %p79 = scmp.eq.s32.totalorder %s18, 0
      %p80 = por %p78, %p79
      %s82 = sadd.s32 %s81, 1
      %p85 = scmp.eq.s32.totalorder %s12, 1
      %p86 = scmp.ne.s32.totalorder %s81, %s83
      %p87 = scmp.eq.s32.totalorder %s12, 0
      %p88 = por %p86, %p87
      %p89 = scmp.ne.s32.totalorder %s81, %s83
      %p90 = scmp.eq.s32.totalorder %s17, 1
      %p91 = por %p89, %p90
      %p92 = scmp.ne.s32.totalorder %s83, %s84
      %p93 = scmp.eq.s32.totalorder %s17, 0
      %p94 = por %p92, %p93
      %p95 = scmp.ne.s32.totalorder %s83, %s84
      %p96 = scmp.eq.s32.totalorder %s18, 1
      %p97 = por %p95, %p96
      %p99 = scmp.ne.s32.totalorder %s84, %s98
      %p100 = scmp.eq.s32.totalorder %s18, 0
      %p101 = por %p99, %p100
      %s102 = ssub.s32 %s19, %s31
      %s103 = ssub.s32 %s20, %s27
      %s104 = sor.u32 %s102, %s103
      %p105 = scmp.eq.s32.totalorder %s104, 0
      %s107 = sadd.s32 %s106, 1
      %s108 = scalar_select %p105, %s106, %s107
      %p111 = pneg %p105
      %p112 = scmp.eq.s32.totalorder %s12, 1
      %p113 = por %p111, %p112
      %p114 = scmp.ne.s32.totalorder %s106, %s109
      %p115 = scmp.eq.s32.totalorder %s12, 0
      %p116 = por %p114, %p115
      %p117 = scmp.ne.s32.totalorder %s106, %s109
      %p118 = scmp.eq.s32.totalorder %s17, 1
      %p119 = por %p117, %p118
      %p120 = scmp.ne.s32.totalorder %s109, %s110
      %p121 = scmp.eq.s32.totalorder %s17, 0
      %p122 = por %p120, %p121
      %p123 = scmp.ne.s32.totalorder %s109, %s110
      %p124 = scmp.eq.s32.totalorder %s18, 1
      %p125 = por %p123, %p124
      %p127 = scmp.ne.s32.totalorder %s110, %s126
      %p128 = scmp.eq.s32.totalorder %s18, 0
      %p129 = por %p127, %p128
      %p130 = scmp.le.s32.totalorder 1, %s12
      %p131 = scmp.lt.s32.totalorder %s12, 3
      %p132 = pnand %p130, %p131
      %p133 = pneg %p132
      // Predicated region
      $region9: #{tpu_custom_call.1} parent=5 // pred_check
        _
      $region10: #{tpu_custom_call.1} parent=5 // pred_check_branch
        %135 = sbr.rel (%p132) target = $region12
      $region11: #{tpu_custom_call.1} parent=5 // pred_region
        %s136 = ssub.s32 %s12, 1
        // Predicated region
        $region13: #{tpu_custom_call.1} parent=11 // pred_check
          %p137 = pneg %p45
        $region14: #{tpu_custom_call.1} parent=11 // pred_check_branch
          %139 = sbr.rel (%p137) target = $region16
        $region15: #{tpu_custom_call.1} parent=11 // pred_region
          _
        $region16: #{tpu_custom_call.1} parent=11 // pred_fallthru
          _
        // Predicated region
        $region17: #{tpu_custom_call.1} parent=11 // pred_check
          %p140 = pneg %p94
        $region18: #{tpu_custom_call.1} parent=11 // pred_check_branch
          %142 = sbr.rel (%p140) target = $region20
        $region19: #{tpu_custom_call.1} parent=11 // pred_region
          _
        $region20: #{tpu_custom_call.1} parent=11 // pred_fallthru
          _
      $region12: #{tpu_custom_call.1} parent=5 // pred_fallthru
        _
      %p143 = scmp.lt.s32.totalorder %s12, 2
      // Predicated region
      $region21: #{tpu_custom_call.1} parent=5 // pred_check
        %p144 = pneg %p143
      $region22: #{tpu_custom_call.1} parent=5 // pred_check_branch
        %146 = sbr.rel (%p144) target = $region24
      $region23: #{tpu_custom_call.1} parent=5 // pred_region
        // Predicated region
        $region25: #{tpu_custom_call.1} parent=23 // pred_check
          %p147 = pneg %p67
        $region26: #{tpu_custom_call.1} parent=23 // pred_check_branch
          %149 = sbr.rel (%p147) target = $region28
        $region27: #{tpu_custom_call.1} parent=23 // pred_region
          %p150 = scmp.lt.s32.totalorder %s19, 1
          %s151 = scalar_select %p150, %s19, 1
          %p152 = scmp.lt.s32.totalorder %s20, 0
          %s153 = scalar_select %p152, %s20, 0
          %s154 = smul.addr %s151, 8
          %s155 = sadd.s32 %s153, %s154
          %s156 = smul.addr %s155, 8
          %s157 = scalar_lea.vmem %s1, %s156
        $region28: #{tpu_custom_call.1} parent=23 // pred_fallthru
          _
      $region24: #{tpu_custom_call.1} parent=5 // pred_fallthru
        _
      %p158 = scmp.le.s32.totalorder 1, %s12
      %p159 = scmp.lt.s32.totalorder %s12, 3
      %p160 = pnand %p158, %p159
      %p161 = pneg %p160
      // Predicated region
      $region29: #{tpu_custom_call.1} parent=5 // pred_check
        _
      $region30: #{tpu_custom_call.1} parent=5 // pred_check_branch
        %163 = sbr.rel (%p160) target = $region32
      $region31: #{tpu_custom_call.1} parent=5 // pred_region
        %s164 = ssub.s32 %s12, 1
        %p165 = pneg %p45
        %p166 = pneg %p42
        %p167 = scmp.lt.s32.totalorder %s21, 1
        %s168 = scalar_select %p167, %s21, 1
        %p169 = scmp.lt.s32.totalorder %s22, 0
        %s170 = scalar_select %p169, %s22, 0
        %s171 = smul.addr %s168, 8
        %s172 = sadd.s32 %s170, %s171
        %s173 = smul.addr %s172, 8
        %s174 = scalar_lea.vmem %s1, %s173
        %p175 = pneg %p73
        %p176 = pneg %p70
        %p177 = pneg %p94
        %p178 = pneg %p91
        %p179 = pneg %p122
        %p180 = pneg %p119
        %s181 = sand.u32 %s109, 1
        %s182 = scalar_lea.sflag [#allocation3], %s181
        %s183 = sand.u32 %s109, 1
        %s184 = smul.addr %s183, 8
        %s185 = scalar_lea.vmem [#allocation2], %s184
        %p186 = scmp.lt.s32.totalorder %s21, 1
        %s187 = scalar_select %p186, %s21, 1
        %p188 = scmp.lt.s32.totalorder %s22, 0
        %s189 = scalar_select %p188, %s22, 0
        %s190 = smul.addr %s187, 8
        %s191 = sadd.s32 %s189, %s190
        %s192 = smul.addr %s191, 8
        %s193 = scalar_lea.vmem %s1, %s192
        %v194 = vld [vmem:[%s0] sm:$0xff]
        %v195 = vld [vmem:[%s0 + $0x8] sm:$0xff]
        %v196 = vld [vmem:[%s193] sm:$0xff]
        %v197 = vld [vmem:[%s193 + $0x8] sm:$0xff]
        %v198 = vld [vmem:[%s193 + $0x10] sm:$0xff]
        %v199 = vld [vmem:[%s193 + $0x18] sm:$0xff]
        %v200 = vld [vmem:[%s193 + $0x20] sm:$0xff]
        %v201 = vld [vmem:[%s193 + $0x28] sm:$0xff]
        %v202 = vld [vmem:[%s193 + $0x30] sm:$0xff]
        %v203 = vld [vmem:[%s193 + $0x38] sm:$0xff]
        %v204 = vld [vmem:[%s2] sm:$0xff]
        %vm205 = vcmask 523264
        %v207 = vsel %vm205, %v194, 0
        %v210 = vsel %vm205, %v195, 0
        %212 = vmatprep.subr.mxu0 0.0
        %213 = vmatpush1.msra.mxu0 0.0
        %214 = vmatprep.subr.mxu0 0.0
        %215 = vmatpush1.msra.mxu0 0.0
        %216 = vmatprep.subr.mxu0 0.0
        %217 = vmatpush1.msra.mxu0 0.0
        %218 = vmatprep.subr.mxu0 0.0
        %219 = vmatpush1.msra.mxu0 0.0
        %220 = vmatprep.subr.mxu0 0.0
        %221 = vmatpush1.msra.mxu0 0.0
        %222 = vmatprep.subr.mxu0 0.0
        %223 = vmatpush1.msra.mxu0 0.0
        %224 = vmatprep.subr.mxu0 0.0
        %225 = vmatpush1.msra.mxu0 0.0
        %226 = vmatprep.subr.mxu0 0.0
        %227 = vmatpush1.msra.mxu0 0.0
        %228 = vmatprep.subr.mxu0 0.0
        %229 = vmatpush1.msra.mxu0 %v203
        %230 = vmatprep.subr.mxu0 0.0
        %231 = vmatpush1.msra.mxu0 %v202
        %232 = vmatprep.subr.mxu0 0.0
        %233 = vmatpush1.msra.mxu0 %v201
        %234 = vmatprep.subr.mxu0 0.0
        %235 = vmatpush1.msra.mxu0 %v200
        %236 = vmatprep.subr.mxu0 0.0
        %237 = vmatpush1.msra.mxu0 %v199
        %238 = vmatprep.subr.mxu0 0.0
        %239 = vmatpush1.msra.mxu0 %v198
        %240 = vmatprep.subr.mxu0 0.0
        %241 = vmatpush1.msra.mxu0 %v197
        %242 = vmatprep.subr.mxu0 0.0
        %243 = vmatpush1.msra.mxu0 %v196
        %244 = vmatprep.subr.mxu0 0.0
        %245 = vmatpush2.msra.mxu0 0.0
        %246 = vmatprep.subr.mxu0 0.0
        %247 = vmatpush2.msra.mxu0 0.0
        %248 = vmatprep.subr.mxu0 0.0
        %249 = vmatpush2.msra.mxu0 0.0
        %250 = vmatprep.subr.mxu0 0.0
        %251 = vmatpush2.msra.mxu0 0.0
        %252 = vmatprep.subr.mxu0 0.0
        %253 = vmatpush2.msra.mxu0 0.0
        %254 = vmatprep.subr.mxu0 0.0
        %255 = vmatpush2.msra.mxu0 0.0
        %256 = vmatprep.subr.mxu0 0.0
        %257 = vmatpush2.msra.mxu0 0.0
        %258 = vmatprep.subr.mxu0 0.0
        %259 = vmatpush2.msra.mxu0 0.0
        %260 = vmatprep.subr.mxu0 0.0
        %261 = vmatpush2.msra.mxu0 0.0
        %262 = vmatprep.subr.mxu0 0.0
        %263 = vmatpush2.msra.mxu0 0.0
        %264 = vmatprep.subr.mxu0 0.0
        %265 = vmatpush2.msra.mxu0 0.0
        %266 = vmatprep.subr.mxu0 0.0
        %267 = vmatpush2.msra.mxu0 0.0
        %268 = vmatprep.subr.mxu0 0.0
        %269 = vmatpush2.msra.mxu0 0.0
        %270 = vmatprep.subr.mxu0 0.0
        %271 = vmatpush2.msra.mxu0 0.0
        %272 = vmatprep.subr.mxu0 0.0
        %273 = vmatpush2.msra.mxu0 0.0
        %274 = vmatprep.subr.mxu0 0.0
        %275 = vmatpush2.msra.mxu0 0.0
        %276 = vmatprep.mubr.f32.mxu0 0.0
        %277 = vmatmul.mubr.f32.gmra.mxu0 %v207
        %v278 = vpop.f32.mrf.mxu0
        %v279 = vadd.f32 0.0, %v278
        %v280 = vpop.f32.mrf.mxu0
        %281 = vmatprep.mubr.f32.mxu0 0.0
        %282 = vmatmul.mubr.f32.gmra.mxu0 %v210
        %v283 = vpop.f32.mrf.mxu0
        %v284 = vadd.f32 0.0, %v283
        %v285 = vpop.f32.mrf.mxu0
        %286 = vdwg.mxu0
        %v287 = vmul.f32 %v279, %v284
        %289 = vset.pattern.permute.xlu0 0
        %290 = vperm.xlu0 %289, %v204
        %v291 = vpop.permute.xlu0 %290
        %v293 = vadd.f32 %v287, %v291
        %vm294 = vcmask 130048
        %295 = vst.msk [vmem:[%s185] sm:$0xff] %vm294, %v293
        %s296 = sand.u32 %s109, 1
        %s297 = scalar_lea.sflag [#allocation3], %s296
        %s298 = sand.u32 %s109, 1
        %s299 = smul.addr %s298, 8
        %s300 = scalar_lea.vmem [#allocation2], %s299
        // Predicated region
        $region33: #{tpu_custom_call.1} parent=31 // pred_check
          %p301 = pneg %p119
        $region34: #{tpu_custom_call.1} parent=31 // pred_check_branch
          %303 = sbr.rel (%p301) target = $region36
        $region35: #{tpu_custom_call.1} parent=31 // pred_region
          %s305 = ssub.s32 128, 128
          %306 = vsyncadd %s297, %s305
          %s307 = sadd.s32 %s22, %s21
          %s308 = smul.addr %s307, 128
          %s309 = scalar_lea.hbm %s3, %s308
          %s311 = sshll.u32 %s300, 4
          %s312 = int_to_ptr.vmem [resolvable:$true] %s311
          %314 = dma.vmem_to_hbm [thread:$0]  %s312, 128, %s309, %s297
        $region36: #{tpu_custom_call.1} parent=31 // pred_fallthru
          _
      $region32: #{tpu_custom_call.1} parent=5 // pred_fallthru
        _
      %p315 = scmp.le.s32.totalorder 2, %s12
      // Predicated region
      $region37: #{tpu_custom_call.1} parent=5 // pred_check
        %p316 = pneg %p315
      $region38: #{tpu_custom_call.1} parent=5 // pred_check_branch
        %318 = sbr.rel (%p316) target = $region40
      $region39: #{tpu_custom_call.1} parent=5 // pred_region
        %s319 = ssub.s32 %s12, 2
        // Predicated region
        $region41: #{tpu_custom_call.1} parent=39 // pred_check
          %p320 = pneg %p125
        $region42: #{tpu_custom_call.1} parent=39 // pred_check_branch
          %322 = sbr.rel (%p320) target = $region44
        $region43: #{tpu_custom_call.1} parent=39 // pred_region
          %s323 = sand.u32 %s110, 1
          %s324 = scalar_lea.sflag [#allocation3], %s323
          %s325 = sand.u32 %s110, 1
          %s326 = smul.addr %s325, 8
          %s327 = scalar_lea.vmem [#allocation2], %s326
          %328 = dma.done %s324, 128
        $region44: #{tpu_custom_call.1} parent=39 // pred_fallthru
          _
      $region40: #{tpu_custom_call.1} parent=5 // pred_fallthru
        _
    $region6: #{tpu_custom_call.1} parent=1 // loop_footer
      %s16 = sadd.s32 1, %s12
    $region7: #{tpu_custom_call.1} parent=1 // loop_footer_branch
      %11 = sbr.rel target = $region3
    $region8: #{tpu_custom_call.1} parent=1 // loop_exit
      _
    %329 = vsyncpa [#allocation3], 1
    %s330 = scalar_lea.sflag [#allocation3], 1
    %331 = vsyncpa %s330, 1

</llo_original>
